<compile_context>
chip_gen: v5e
topology: v5e:2x2
jax: 0.10.0
libtpu: 0.0.40
codegen_flags: <defaults>
</compile_context>

<pallas_src>
import jax
import jax.numpy as jnp
from jax.experimental import pallas as pl
from jax.experimental.pallas import tpu as pltpu

# ---- static problem sizes (small, consistent with the module's forward) ----
B = 2
CIN = 4
H = W = 16
C1 = 32          # model1 conv out channels
C2 = 32          # model2 conv out channels
F1 = 16          # model1.fc.out_features
F2 = 16          # model2.classifier.out_features
NUM_CLASSES = 8
KH = KW = 3

M = B * H * W            # 512  rows of the im2col matmul (batch folded into M)
KCOL = KH * KW * CIN     # 36   im2col contraction size (cin slowest, then kh, kw)
COUT = C1 + C2           # 64   fused conv output channels
FCAT = F1 + F2           # 32   concatenated head features


# ----------------------------------------------------------------------------
# Single fused kernel: conv(im2col matmul) + bias + ReLU + GAP(matmul) +
#                      fused (heads ∘ stacking-fc) matmul.
# ----------------------------------------------------------------------------
def fused_stacking_kernel(patches_ref, wconv_ref, bias_ref, wcomb_ref, o_ref):
    # patches_ref: (M, KCOL)            im2col patch matrix (both branches share it)
    # wconv_ref:   (KCOL, COUT)         [w1c | w2c], rows ordered (cin, kh, kw)
    # bias_ref:    (2, COUT)            row0 = conv bias, row1[:NUM_CLASSES] = fused head bias
    # wcomb_ref:   (COUT, NUM_CLASSES)  blockdiag(w1l, w2l) @ wfc
    # o_ref:       (B, NUM_CLASSES)
    bias = bias_ref[...]
    act = jnp.maximum(
        jnp.dot(patches_ref[...], wconv_ref[...],
                preferred_element_type=jnp.float32) + bias[0:1, :], 0.0)    # (M, COUT)

    # Global average pool as an MXU matmul; pooling matrix built on the VPU
    # from iotas (no operand DMA, no cross-sublane reshape/reduce).
    row = jax.lax.broadcasted_iota(jnp.int32, (B, M), 0)
    col = jax.lax.broadcasted_iota(jnp.int32, (B, M), 1)
    start = row * (H * W)
    pool = jnp.where((col >= start) & (col < start + H * W),
                     1.0 / (H * W), 0.0).astype(jnp.float32)                # (B, M)
    gap = jnp.dot(pool, act, preferred_element_type=jnp.float32)            # (B, COUT)

    o_ref[...] = (jnp.dot(gap, wcomb_ref[...],
                          preferred_element_type=jnp.float32)
                  + bias[1:2, :NUM_CLASSES])                                # (B, NUM_CLASSES)


def fused_stacking_call(patches, pk):
    vmem = pl.BlockSpec(memory_space=pltpu.MemorySpace.VMEM)
    return pl.pallas_call(
        fused_stacking_kernel,
        out_shape=jax.ShapeDtypeStruct((B, NUM_CLASSES), jnp.float32),
        in_specs=[vmem, vmem, vmem, vmem],
        out_specs=vmem,
    )(patches, pk["w_conv"], pk["biases"], pk["w_comb"])


# ----------------------------------------------------------------------------
# Wrapper-side layout prep (pack_params runs ONCE, outside the jitted forward)
# ----------------------------------------------------------------------------
def pack_params(p):
    """Repack PyTorch-style per-branch params into fused, lane-dense operands."""
    # Fused conv weight; rows ordered (cin, kh, kw) to match
    # lax.conv_general_dilated_patches' output-channel ordering.
    w_all = jnp.concatenate([p["w1c"], p["w2c"]], axis=-1)                  # (3,3,4,64) HWIO
    w_conv = jnp.transpose(w_all, (2, 0, 1, 3)).reshape(KCOL, COUT)         # (36, 64)
    b_conv = jnp.concatenate([p["b1c"], p["b2c"]])                          # (64,)

    # concat(g1@W1+b1, g2@W2+b2) @ Wfc + bfc
    #   == g @ (blockdiag(W1,W2) @ Wfc) + ([b1 b2] @ Wfc + bfc)
    w_heads = jnp.zeros((COUT, FCAT), jnp.float32)
    w_heads = w_heads.at[:C1, :F1].set(p["w1l"]).at[C1:, F1:].set(p["w2l"])
    b_heads = jnp.concatenate([p["b1l"], p["b2l"]])                         # (32,)
    w_comb = w_heads @ p["wfc"]                                             # (64, 8)
    b_comb = b_heads @ p["wfc"] + p["bfc"]                                  # (8,)

    biases = jnp.zeros((2, COUT), jnp.float32)
    biases = biases.at[0, :].set(b_conv).at[1, :NUM_CLASSES].set(b_comb)    # (2, 64)
    return {"w_conv": w_conv, "biases": biases, "w_comb": w_comb}


@jax.jit
def stacking_forward(x_nchw, packed):
    # Single-op im2col: identity-kernel conv extracts SAME-padded patches with
    # output channels ordered (cin, kh, kw); HIGHEST precision keeps them exact.
    patches = jax.lax.conv_general_dilated_patches(
        x_nchw, filter_shape=(KH, KW), window_strides=(1, 1), padding="SAME",
        dimension_numbers=("NCHW", "OIHW", "NHWC"),
        precision=jax.lax.Precision.HIGHEST)                                # (B, H, W, 36)
    return fused_stacking_call(patches.reshape(M, KCOL), packed)


# ----------------------------------------------------------------------------
# Pure-JAX reference (unfused, NHWC conv) and param init
# ----------------------------------------------------------------------------
def ref_forward(x_nchw, params):
    x = jnp.transpose(x_nchw, (0, 2, 3, 1))

    def branch(wc, bc, wl, bl):
        y = jax.lax.conv_general_dilated(
            x, wc, window_strides=(1, 1), padding="SAME",
            dimension_numbers=("NHWC", "HWIO", "NHWC"),
            precision=jax.lax.Precision.HIGHEST)
        y = jnp.maximum(y + bc[None, None, None, :], 0.0)
        g = jnp.mean(y, axis=(1, 2))
        return g @ wl + bl

    x1 = branch(params["w1c"], params["b1c"], params["w1l"], params["b1l"])
    x2 = branch(params["w2c"], params["b2c"], params["w2l"], params["b2l"])
    cat = jnp.concatenate([x1, x2], axis=1)
    return cat @ params["wfc"] + params["bfc"]


def init_params(key):
    ks = jax.random.split(key, 10)
    n = lambda k, s, scale=0.1: (scale * jax.random.normal(k, s)).astype(jnp.float32)
    return {
        "w1c": n(ks[0], (KH, KW, CIN, C1)), "b1c": n(ks[1], (C1,)),
        "w1l": n(ks[2], (C1, F1)),          "b1l": n(ks[3], (F1,)),
        "w2c": n(ks[4], (KH, KW, CIN, C2)), "b2c": n(ks[5], (C2,)),
        "w2l": n(ks[6], (C2, F2)),          "b2l": n(ks[7], (F2,)),
        "wfc": n(ks[8], (F1 + F2, NUM_CLASSES)), "bfc": n(ks[9], (NUM_CLASSES,)),
    }


if __name__ == "__main__":
    key = jax.random.PRNGKey(0)
    k_x, k_p = jax.random.split(key)
    x = jax.random.normal(k_x, (B, CIN, H, W), dtype=jnp.float32)   # NCHW like PyTorch
    params = init_params(k_p)
    packed = pack_params(params)                                    # one-time repack

    out = jax.block_until_ready(stacking_forward(x, packed))
    ref = ref_forward(x, params)

    assert out.shape == (B, NUM_CLASSES), out.shape
    assert jnp.allclose(out, ref, atol=1e-4, rtol=1e-4), (out, ref)
    print("KERNEL_OK")
</pallas_src>

<mosaic_0001>
module attributes {stable_mosaic.version = 11 : i64} {
  func.func @fused_stacking_kernel(%arg0: memref<512x36xf32, #tpu.memory_space<vmem>>, %arg1: memref<36x64xf32, #tpu.memory_space<vmem>>, %arg2: memref<2x64xf32, #tpu.memory_space<vmem>>, %arg3: memref<64x8xf32, #tpu.memory_space<vmem>>, %arg4: memref<2x8xf32, #tpu.memory_space<vmem>>) attributes {dimension_semantics = [], scalar_prefetch = 0 : i64, scratch_operands = 0 : i64, tpu.core_type = #tpu.core_type<tc>} {
    %c0 = arith.constant 0 : index
    %c0_0 = arith.constant 0 : index
    %0 = vector.load %arg2[%c0, %c0_0] : memref<2x64xf32, #tpu.memory_space<vmem>>, vector<2x64xf32>
    %c0_1 = arith.constant 0 : index
    %c0_2 = arith.constant 0 : index
    %1 = vector.load %arg0[%c0_1, %c0_2] : memref<512x36xf32, #tpu.memory_space<vmem>>, vector<512x36xf32>
    %c0_3 = arith.constant 0 : index
    %c0_4 = arith.constant 0 : index
    %2 = vector.load %arg1[%c0_3, %c0_4] : memref<36x64xf32, #tpu.memory_space<vmem>>, vector<36x64xf32>
    %cst = arith.constant dense<0.000000e+00> : vector<512x64xf32>
    %3 = tpu.matmul %1, %2, %cst {dimension_numbers = #tpu.dot_dimension_numbers<[1], [0], [0], [1], [0, 0, 1, 1], [], []>} : vector<512x36xf32>, vector<36x64xf32>, vector<512x64xf32> -> vector<512x64xf32>
    %4 = vector.extract_strided_slice %0 {offsets = [0, 0], sizes = [1, 64], strides = [1, 1]} : vector<2x64xf32> to vector<1x64xf32>
    %5 = vector.broadcast %4 : vector<1x64xf32> to vector<512x64xf32>
    %6 = arith.addf %3, %5 : vector<512x64xf32>
    %cst_5 = arith.constant 0.000000e+00 : f32
    %7 = vector.broadcast %cst_5 : f32 to vector<512x64xf32>
    %8 = arith.maximumf %6, %7 : vector<512x64xf32>
    %9 = tpu.iota {dimensions = array<i32: 0>} : vector<2x512xi32>
    %10 = tpu.iota {dimensions = array<i32: 1>} : vector<2x512xi32>
    %c256_i32 = arith.constant 256 : i32
    %11 = vector.broadcast %c256_i32 : i32 to vector<2x512xi32>
    %12 = arith.muli %9, %11 : vector<2x512xi32>
    %13 = arith.cmpi sge, %10, %12 : vector<2x512xi32>
    %c256_i32_6 = arith.constant 256 : i32
    %14 = vector.broadcast %c256_i32_6 : i32 to vector<2x512xi32>
    %15 = arith.addi %12, %14 : vector<2x512xi32>
    %16 = arith.cmpi slt, %10, %15 : vector<2x512xi32>
    %17 = arith.andi %13, %16 : vector<2x512xi1>
    %cst_7 = arith.constant 3.906250e-03 : f32
    %cst_8 = arith.constant 0.000000e+00 : f32
    %18 = vector.broadcast %cst_7 : f32 to vector<2x512xf32>
    %19 = vector.broadcast %cst_8 : f32 to vector<2x512xf32>
    %20 = arith.select %17, %18, %19 : vector<2x512xi1>, vector<2x512xf32>
    %cst_9 = arith.constant dense<0.000000e+00> : vector<2x64xf32>
    %21 = tpu.matmul %20, %8, %cst_9 {dimension_numbers = #tpu.dot_dimension_numbers<[1], [0], [0], [1], [0, 0, 1, 1], [], []>} : vector<2x512xf32>, vector<512x64xf32>, vector<2x64xf32> -> vector<2x64xf32>
    %c0_10 = arith.constant 0 : index
    %c0_11 = arith.constant 0 : index
    %22 = vector.load %arg3[%c0_10, %c0_11] : memref<64x8xf32, #tpu.memory_space<vmem>>, vector<64x8xf32>
    %cst_12 = arith.constant dense<0.000000e+00> : vector<2x8xf32>
    %23 = tpu.matmul %21, %22, %cst_12 {dimension_numbers = #tpu.dot_dimension_numbers<[1], [0], [0], [1], [0, 0, 1, 1], [], []>} : vector<2x64xf32>, vector<64x8xf32>, vector<2x8xf32> -> vector<2x8xf32>
    %24 = vector.extract_strided_slice %0 {offsets = [1, 0], sizes = [1, 8], strides = [1, 1]} : vector<2x64xf32> to vector<1x8xf32>
    %25 = vector.broadcast %24 : vector<1x8xf32> to vector<2x8xf32>
    %26 = arith.addf %23, %25 : vector<2x8xf32>
    %c0_13 = arith.constant 0 : index
    %c0_14 = arith.constant 0 : index
    %27 = vector.load %arg4[%c0_13, %c0_14] : memref<2x8xf32, #tpu.memory_space<vmem>>, vector<2x8xf32>
    tpu.vector_store %arg4[%c0_13, %c0_14], %26 {strides = array<i32>} : memref<2x8xf32, #tpu.memory_space<vmem>>, vector<2x8xf32>,
    return
  }
}

</mosaic_0001>

<llo_original>
// kernel: stacking_forward.1
$region0: #{stacking_forward.1}
  #allocation0 [shape = 'u32[]', space=smem, size = 0x4, offset = 0x4, fixed_abs, tag = 'smem constant byte address 0x4 - core index']
  #allocation1 [shape = 'u32[72,128]{1,0:T(1,128)}', space=vmem, size = 0x9000, scoped, tag = 'internal scratch']
  %s0 = inlined_call_operand.vmem [shape: f32[512,36], index: 0, kind: input, shape index: {}]
  %s1 = inlined_call_operand.vmem [shape: f32[36,64], index: 1, kind: input, shape index: {}]
  %s2 = inlined_call_operand.vmem [shape: f32[2,64], index: 2, kind: input, shape index: {}]
  %s3 = inlined_call_operand.vmem [shape: f32[64,8], index: 3, kind: input, shape index: {}]
  %s4 = inlined_call_operand.hbm [shape: f32[2,8], index: 4, kind: output, shape index: {}]
  %s5 = sld [smem:[#allocation0]]
  $region26: #{stacking_forward.1} parent=0
    _
  %s7 = ssub.s32 1, %s5
  %s8 = scalar_select 0, %s7, %s5
  $region1: #{stacking_forward.1} parent=0
    #allocation2 [shape = 'u8[1024]{0}', space=vmem, size = 0x400, scoped, tag = 'output window, operand 0, single buffered']
    #allocation3 [shape = 's32[1]{0}', space=sflag, size = 0x4, scoped, tag = 'scoped memory for stacking_forward.1']
    %9 = vsyncpa [#allocation3], 0
    // Predicated region
    $region2: #{stacking_forward.1} parent=1 // pred_check
      _
    $region3: #{stacking_forward.1} parent=1 // pred_check_branch
      %11 = sbr.rel (0) target = $region5
    $region4: #{stacking_forward.1} parent=1 // pred_region
      _
    $region5: #{stacking_forward.1} parent=1 // pred_fallthru
      _
    // Predicated region
    $region6: #{stacking_forward.1} parent=1 // pred_check
      _
    $region7: #{stacking_forward.1} parent=1 // pred_check_branch
      %13 = sbr.rel (0) target = $region9
    $region8: #{stacking_forward.1} parent=1 // pred_region
      _
    $region9: #{stacking_forward.1} parent=1 // pred_fallthru
      _
    // Predicated region
    $region10: #{stacking_forward.1} parent=1 // pred_check
      _
    $region11: #{stacking_forward.1} parent=1 // pred_check_branch
      %15 = sbr.rel (0) target = $region13
    $region12: #{stacking_forward.1} parent=1 // pred_region
      _
    $region13: #{stacking_forward.1} parent=1 // pred_fallthru
      _
    // Predicated region
    $region14: #{stacking_forward.1} parent=1 // pred_check
      _
    $region15: #{stacking_forward.1} parent=1 // pred_check_branch
      %17 = sbr.rel (0) target = $region17
    $region16: #{stacking_forward.1} parent=1 // pred_region
      _
    $region17: #{stacking_forward.1} parent=1 // pred_fallthru
      _
    %v18 = vld [vmem:[%s2] sm:$0x3]
    %v19 = vld [vmem:[%s0] sm:$0xff]
    %v20 = vld [vmem:[%s0 + $0x8] sm:$0xff]
    %v21 = vld [vmem:[%s0 + $0x10] sm:$0xff]
    %v22 = vld [vmem:[%s0 + $0x18] sm:$0xff]
    %v23 = vld [vmem:[%s0 + $0x20] sm:$0xff]
    %v24 = vld [vmem:[%s0 + $0x28] sm:$0xff]
    %v25 = vld [vmem:[%s0 + $0x30] sm:$0xff]
    %v26 = vld [vmem:[%s0 + $0x38] sm:$0xff]
    %v27 = vld [vmem:[%s0 + $0x40] sm:$0xff]
    %v28 = vld [vmem:[%s0 + $0x48] sm:$0xff]
    %v29 = vld [vmem:[%s0 + $0x50] sm:$0xff]
    %v30 = vld [vmem:[%s0 + $0x58] sm:$0xff]
    %v31 = vld [vmem:[%s0 + $0x60] sm:$0xff]
    %v32 = vld [vmem:[%s0 + $0x68] sm:$0xff]
    %v33 = vld [vmem:[%s0 + $0x70] sm:$0xff]
    %v34 = vld [vmem:[%s0 + $0x78] sm:$0xff]
    %v35 = vld [vmem:[%s0 + $0x80] sm:$0xff]
    %v36 = vld [vmem:[%s0 + $0x88] sm:$0xff]
    %v37 = vld [vmem:[%s0 + $0x90] sm:$0xff]
    %v38 = vld [vmem:[%s0 + $0x98] sm:$0xff]
    %v39 = vld [vmem:[%s0 + $0xa0] sm:$0xff]
    %v40 = vld [vmem:[%s0 + $0xa8] sm:$0xff]
    %v41 = vld [vmem:[%s0 + $0xb0] sm:$0xff]
    %v42 = vld [vmem:[%s0 + $0xb8] sm:$0xff]
    %v43 = vld [vmem:[%s0 + $0xc0] sm:$0xff]
    %v44 = vld [vmem:[%s0 + $0xc8] sm:$0xff]
    %v45 = vld [vmem:[%s0 + $0xd0] sm:$0xff]
    %v46 = vld [vmem:[%s0 + $0xd8] sm:$0xff]
    %v47 = vld [vmem:[%s0 + $0xe0] sm:$0xff]
    %v48 = vld [vmem:[%s0 + $0xe8] sm:$0xff]
    %v49 = vld [vmem:[%s0 + $0xf0] sm:$0xff]
    %v50 = vld [vmem:[%s0 + $0xf8] sm:$0xff]
    %v51 = vld [vmem:[%s0 + $0x100] sm:$0xff]
    %v52 = vld [vmem:[%s0 + $0x108] sm:$0xff]
    %v53 = vld [vmem:[%s0 + $0x110] sm:$0xff]
    %v54 = vld [vmem:[%s0 + $0x118] sm:$0xff]
    %v55 = vld [vmem:[%s0 + $0x120] sm:$0xff]
    %v56 = vld [vmem:[%s0 + $0x128] sm:$0xff]
    %v57 = vld [vmem:[%s0 + $0x130] sm:$0xff]
    %v58 = vld [vmem:[%s0 + $0x138] sm:$0xff]
    %v59 = vld [vmem:[%s0 + $0x140] sm:$0xff]
    %v60 = vld [vmem:[%s0 + $0x148] sm:$0xff]
    %v61 = vld [vmem:[%s0 + $0x150] sm:$0xff]
    %v62 = vld [vmem:[%s0 + $0x158] sm:$0xff]
    %v63 = vld [vmem:[%s0 + $0x160] sm:$0xff]
    %v64 = vld [vmem:[%s0 + $0x168] sm:$0xff]
    %v65 = vld [vmem:[%s0 + $0x170] sm:$0xff]
    %v66 = vld [vmem:[%s0 + $0x178] sm:$0xff]
    %v67 = vld [vmem:[%s0 + $0x180] sm:$0xff]
    %v68 = vld [vmem:[%s0 + $0x188] sm:$0xff]
    %v69 = vld [vmem:[%s0 + $0x190] sm:$0xff]
    %v70 = vld [vmem:[%s0 + $0x198] sm:$0xff]
    %v71 = vld [vmem:[%s0 + $0x1a0] sm:$0xff]
    %v72 = vld [vmem:[%s0 + $0x1a8] sm:$0xff]
    %v73 = vld [vmem:[%s0 + $0x1b0] sm:$0xff]
    %v74 = vld [vmem:[%s0 + $0x1b8] sm:$0xff]
    %v75 = vld [vmem:[%s0 + $0x1c0] sm:$0xff]
    %v76 = vld [vmem:[%s0 + $0x1c8] sm:$0xff]
    %v77 = vld [vmem:[%s0 + $0x1d0] sm:$0xff]
    %v78 = vld [vmem:[%s0 + $0x1d8] sm:$0xff]
    %v79 = vld [vmem:[%s0 + $0x1e0] sm:$0xff]
    %v80 = vld [vmem:[%s0 + $0x1e8] sm:$0xff]
    %v81 = vld [vmem:[%s0 + $0x1f0] sm:$0xff]
    %v82 = vld [vmem:[%s0 + $0x1f8] sm:$0xff]
    %v83 = vld [vmem:[%s1] sm:$0xff]
    %v84 = vld [vmem:[%s1 + $0x8] sm:$0xff]
    %v85 = vld [vmem:[%s1 + $0x10] sm:$0xff]
    %v86 = vld [vmem:[%s1 + $0x18] sm:$0xff]
    %v87 = vld [vmem:[%s1 + $0x20] sm:$0xf]
    %v88 = vperm.slane %v18, 0
    %vm89 = vcmask 293888
    %v91 = vsel %vm89, %v19, 0
    %v94 = vsel %vm89, %v20, 0
    %v97 = vsel %vm89, %v21, 0
    %v100 = vsel %vm89, %v22, 0
    %v103 = vsel %vm89, %v23, 0
    %v106 = vsel %vm89, %v24, 0
    %v109 = vsel %vm89, %v25, 0
    %v112 = vsel %vm89, %v26, 0
    %v115 = vsel %vm89, %v27, 0
    %v118 = vsel %vm89, %v28, 0
    %v121 = vsel %vm89, %v29, 0
    %v124 = vsel %vm89, %v30, 0
    %v127 = vsel %vm89, %v31, 0
    %v130 = vsel %vm89, %v32, 0
    %v133 = vsel %vm89, %v33, 0
    %v136 = vsel %vm89, %v34, 0
    %v139 = vsel %vm89, %v35, 0
    %v142 = vsel %vm89, %v36, 0
    %v145 = vsel %vm89, %v37, 0
    %v148 = vsel %vm89, %v38, 0
    %v151 = vsel %vm89, %v39, 0
    %v154 = vsel %vm89, %v40, 0
    %v157 = vsel %vm89, %v41, 0
    %v160 = vsel %vm89, %v42, 0
    %v163 = vsel %vm89, %v43, 0
    %v166 = vsel %vm89, %v44, 0
    %v169 = vsel %vm89, %v45, 0
    %v172 = vsel %vm89, %v46, 0
    %v175 = vsel %vm89, %v47, 0
    %v178 = vsel %vm89, %v48, 0
    %v181 = vsel %vm89, %v49, 0
    %v184 = vsel %vm89, %v50, 0
    %v187 = vsel %vm89, %v51, 0
    %v190 = vsel %vm89, %v52, 0
    %v193 = vsel %vm89, %v53, 0
    %v196 = vsel %vm89, %v54, 0
    %v199 = vsel %vm89, %v55, 0
    %v202 = vsel %vm89, %v56, 0
    %v205 = vsel %vm89, %v57, 0
    %v208 = vsel %vm89, %v58, 0
    %v211 = vsel %vm89, %v59, 0
    %v214 = vsel %vm89, %v60, 0
    %v217 = vsel %vm89, %v61, 0
    %v220 = vsel %vm89, %v62, 0
    %v223 = vsel %vm89, %v63, 0
    %v226 = vsel %vm89, %v64, 0
    %v229 = vsel %vm89, %v65, 0
    %v232 = vsel %vm89, %v66, 0
    %v235 = vsel %vm89, %v67, 0
    %v238 = vsel %vm89, %v68, 0
    %v241 = vsel %vm89, %v69, 0
    %v244 = vsel %vm89, %v70, 0
    %v247 = vsel %vm89, %v71, 0
    %v250 = vsel %vm89, %v72, 0
    %v253 = vsel %vm89, %v73, 0
    %v256 = vsel %vm89, %v74, 0
    %v259 = vsel %vm89, %v75, 0
    %v262 = vsel %vm89, %v76, 0
    %v265 = vsel %vm89, %v77, 0
    %v268 = vsel %vm89, %v78, 0
    %v271 = vsel %vm89, %v79, 0
    %v274 = vsel %vm89, %v80, 0
    %v277 = vsel %vm89, %v81, 0
    %v280 = vsel %vm89, %v82, 0
    %vm282 = vcmask 1043456
    %v284 = vsel %vm282, %v87, 0
    %286 = vmatpush.msra.mxu0 0.0
    %287 = vmatpush.msra.mxu0 0.0
    %288 = vmatpush.msra.mxu0 0.0
    %289 = vmatpush.msra.mxu0 0.0
    %290 = vmatpush.msra.mxu0 0.0
    %291 = vmatpush.msra.mxu0 0.0
    %292 = vmatpush.msra.mxu0 0.0
    %293 = vmatpush.msra.mxu0 0.0
    %294 = vmatpush.msra.mxu0 0.0
    %295 = vmatpush.msra.mxu0 0.0
    %296 = vmatpush.msra.mxu0 0.0
    %297 = vmatpush.msra.mxu0 %v284
    %298 = vmatpush.msra.mxu0 %v86
    %299 = vmatpush.msra.mxu0 %v85
    %300 = vmatpush.msra.mxu0 %v84
    %301 = vmatpush.msra.mxu0 %v83
    %302 = vmatmul.f32.gmra.mxu0 %v91
    %v303 = vpop.f32.mrf.mxu0
    %v304 = vadd.f32 %v88, %v303
    %305 = vmatmul.f32.gmra.mxu0 %v94
    %v306 = vpop.f32.mrf.mxu0
    %v307 = vadd.f32 %v88, %v306
    %308 = vmatmul.f32.gmra.mxu0 %v97
    %v309 = vpop.f32.mrf.mxu0
    %v310 = vadd.f32 %v88, %v309
    %311 = vmatmul.f32.gmra.mxu0 %v100
    %v312 = vpop.f32.mrf.mxu0
    %v313 = vadd.f32 %v88, %v312
    %314 = vmatmul.f32.gmra.mxu0 %v103
    %v315 = vpop.f32.mrf.mxu0
    %v316 = vadd.f32 %v88, %v315
    %317 = vmatmul.f32.gmra.mxu0 %v106
    %v318 = vpop.f32.mrf.mxu0
    %v319 = vadd.f32 %v88, %v318
    %320 = vmatmul.f32.gmra.mxu0 %v109
    %v321 = vpop.f32.mrf.mxu0
    %v322 = vadd.f32 %v88, %v321
    %323 = vmatmul.f32.gmra.mxu0 %v112
    %v324 = vpop.f32.mrf.mxu0
    %v325 = vadd.f32 %v88, %v324
    %326 = vmatmul.f32.gmra.mxu0 %v115
    %v327 = vpop.f32.mrf.mxu0
    %v328 = vadd.f32 %v88, %v327
    %329 = vmatmul.f32.gmra.mxu0 %v118
    %v330 = vpop.f32.mrf.mxu0
    %v331 = vadd.f32 %v88, %v330
    %332 = vmatmul.f32.gmra.mxu0 %v121
    %v333 = vpop.f32.mrf.mxu0
    %v334 = vadd.f32 %v88, %v333
    %335 = vmatmul.f32.gmra.mxu0 %v124
    %v336 = vpop.f32.mrf.mxu0
    %v337 = vadd.f32 %v88, %v336
    %338 = vmatmul.f32.gmra.mxu0 %v127
    %v339 = vpop.f32.mrf.mxu0
    %v340 = vadd.f32 %v88, %v339
    %341 = vmatmul.f32.gmra.mxu0 %v130
    %v342 = vpop.f32.mrf.mxu0
    %v343 = vadd.f32 %v88, %v342
    %344 = vmatmul.f32.gmra.mxu0 %v133
    %v345 = vpop.f32.mrf.mxu0
    %v346 = vadd.f32 %v88, %v345
    %347 = vmatmul.f32.gmra.mxu0 %v136
    %v348 = vpop.f32.mrf.mxu0
    %v349 = vadd.f32 %v88, %v348
    %350 = vmatmul.f32.gmra.mxu0 %v139
    %v351 = vpop.f32.mrf.mxu0
    %v352 = vadd.f32 %v88, %v351
    %353 = vmatmul.f32.gmra.mxu0 %v142
    %v354 = vpop.f32.mrf.mxu0
    %v355 = vadd.f32 %v88, %v354
    %356 = vmatmul.f32.gmra.mxu0 %v145
    %v357 = vpop.f32.mrf.mxu0
    %v358 = vadd.f32 %v88, %v357
    %359 = vmatmul.f32.gmra.mxu0 %v148
    %v360 = vpop.f32.mrf.mxu0
    %v361 = vadd.f32 %v88, %v360
    %362 = vmatmul.f32.gmra.mxu0 %v151
    %v363 = vpop.f32.mrf.mxu0
    %v364 = vadd.f32 %v88, %v363
    %365 = vmatmul.f32.gmra.mxu0 %v154
    %v366 = vpop.f32.mrf.mxu0
    %v367 = vadd.f32 %v88, %v366
    %368 = vmatmul.f32.gmra.mxu0 %v157
    %v369 = vpop.f32.mrf.mxu0
    %v370 = vadd.f32 %v88, %v369
    %371 = vmatmul.f32.gmra.mxu0 %v160
    %v372 = vpop.f32.mrf.mxu0
    %v373 = vadd.f32 %v88, %v372
    %374 = vmatmul.f32.gmra.mxu0 %v163
    %v375 = vpop.f32.mrf.mxu0
    %v376 = vadd.f32 %v88, %v375
    %377 = vmatmul.f32.gmra.mxu0 %v166
    %v378 = vpop.f32.mrf.mxu0
    %v379 = vadd.f32 %v88, %v378
    %380 = vmatmul.f32.gmra.mxu0 %v169
    %v381 = vpop.f32.mrf.mxu0
    %v382 = vadd.f32 %v88, %v381
    %383 = vmatmul.f32.gmra.mxu0 %v172
    %v384 = vpop.f32.mrf.mxu0
    %v385 = vadd.f32 %v88, %v384
    %386 = vmatmul.f32.gmra.mxu0 %v175
    %v387 = vpop.f32.mrf.mxu0
    %v388 = vadd.f32 %v88, %v387
    %389 = vmatmul.f32.gmra.mxu0 %v178
    %v390 = vpop.f32.mrf.mxu0
    %v391 = vadd.f32 %v88, %v390
    %392 = vmatmul.f32.gmra.mxu0 %v181
    %v393 = vpop.f32.mrf.mxu0
    %v394 = vadd.f32 %v88, %v393
    %395 = vmatmul.f32.gmra.mxu0 %v184
    %v396 = vpop.f32.mrf.mxu0
    %v397 = vadd.f32 %v88, %v396
    %398 = vmatmul.f32.gmra.mxu0 %v187
    %v399 = vpop.f32.mrf.mxu0
    %v400 = vadd.f32 %v88, %v399
    %401 = vmatmul.f32.gmra.mxu0 %v190
    %v402 = vpop.f32.mrf.mxu0
    %v403 = vadd.f32 %v88, %v402
    %404 = vmatmul.f32.gmra.mxu0 %v193
    %v405 = vpop.f32.mrf.mxu0
    %v406 = vadd.f32 %v88, %v405
    %407 = vmatmul.f32.gmra.mxu0 %v196
    %v408 = vpop.f32.mrf.mxu0
    %v409 = vadd.f32 %v88, %v408
    %410 = vmatmul.f32.gmra.mxu0 %v199
    %v411 = vpop.f32.mrf.mxu0
    %v412 = vadd.f32 %v88, %v411
    %413 = vmatmul.f32.gmra.mxu0 %v202
    %v414 = vpop.f32.mrf.mxu0
    %v415 = vadd.f32 %v88, %v414
    %416 = vmatmul.f32.gmra.mxu0 %v205
    %v417 = vpop.f32.mrf.mxu0
    %v418 = vadd.f32 %v88, %v417
    %419 = vmatmul.f32.gmra.mxu0 %v208
    %v420 = vpop.f32.mrf.mxu0
    %v421 = vadd.f32 %v88, %v420
    %422 = vmatmul.f32.gmra.mxu0 %v211
    %v423 = vpop.f32.mrf.mxu0
    %v424 = vadd.f32 %v88, %v423
    %425 = vmatmul.f32.gmra.mxu0 %v214
    %v426 = vpop.f32.mrf.mxu0
    %v427 = vadd.f32 %v88, %v426
    %428 = vmatmul.f32.gmra.mxu0 %v217
    %v429 = vpop.f32.mrf.mxu0
    %v430 = vadd.f32 %v88, %v429
    %431 = vmatmul.f32.gmra.mxu0 %v220
    %v432 = vpop.f32.mrf.mxu0
    %v433 = vadd.f32 %v88, %v432
    %434 = vmatmul.f32.gmra.mxu0 %v223
    %v435 = vpop.f32.mrf.mxu0
    %v436 = vadd.f32 %v88, %v435
    %437 = vmatmul.f32.gmra.mxu0 %v226
    %v438 = vpop.f32.mrf.mxu0
    %v439 = vadd.f32 %v88, %v438
    %440 = vmatmul.f32.gmra.mxu0 %v229
    %v441 = vpop.f32.mrf.mxu0
    %v442 = vadd.f32 %v88, %v441
    %443 = vmatmul.f32.gmra.mxu0 %v232
    %v444 = vpop.f32.mrf.mxu0
    %v445 = vadd.f32 %v88, %v444
    %446 = vmatmul.f32.gmra.mxu0 %v235
    %v447 = vpop.f32.mrf.mxu0
    %v448 = vadd.f32 %v88, %v447
    %449 = vmatmul.f32.gmra.mxu0 %v238
    %v450 = vpop.f32.mrf.mxu0
    %v451 = vadd.f32 %v88, %v450
    %452 = vmatmul.f32.gmra.mxu0 %v241
    %v453 = vpop.f32.mrf.mxu0
    %v454 = vadd.f32 %v88, %v453
    %455 = vmatmul.f32.gmra.mxu0 %v244
    %v456 = vpop.f32.mrf.mxu0
    %v457 = vadd.f32 %v88, %v456
    %458 = vmatmul.f32.gmra.mxu0 %v247
    %v459 = vpop.f32.mrf.mxu0
    %v460 = vadd.f32 %v88, %v459
    %461 = vmatmul.f32.gmra.mxu0 %v250
    %v462 = vpop.f32.mrf.mxu0
    %v463 = vadd.f32 %v88, %v462
    %464 = vmatmul.f32.gmra.mxu0 %v253
    %v465 = vpop.f32.mrf.mxu0
    %v466 = vadd.f32 %v88, %v465
    %467 = vmatmul.f32.gmra.mxu0 %v256
    %v468 = vpop.f32.mrf.mxu0
    %v469 = vadd.f32 %v88, %v468
    %470 = vmatmul.f32.gmra.mxu0 %v259
    %v471 = vpop.f32.mrf.mxu0
    %v472 = vadd.f32 %v88, %v471
    %473 = vmatmul.f32.gmra.mxu0 %v262
    %v474 = vpop.f32.mrf.mxu0
    %v475 = vadd.f32 %v88, %v474
    %476 = vmatmul.f32.gmra.mxu0 %v265
    %v477 = vpop.f32.mrf.mxu0
    %v478 = vadd.f32 %v88, %v477
    %479 = vmatmul.f32.gmra.mxu0 %v268
    %v480 = vpop.f32.mrf.mxu0
    %v481 = vadd.f32 %v88, %v480
    %482 = vmatmul.f32.gmra.mxu0 %v271
    %v483 = vpop.f32.mrf.mxu0
    %v484 = vadd.f32 %v88, %v483
    %485 = vmatmul.f32.gmra.mxu0 %v274
    %v486 = vpop.f32.mrf.mxu0
    %v487 = vadd.f32 %v88, %v486
    %488 = vmatmul.f32.gmra.mxu0 %v277
    %v489 = vpop.f32.mrf.mxu0
    %v490 = vadd.f32 %v88, %v489
    %491 = vmatmul.f32.gmra.mxu0 %v280
    %v492 = vpop.f32.mrf.mxu0
    %v493 = vadd.f32 %v88, %v492
    %494 = vdwg.mxu0
    %v495 = vmax.f32 %v304, 0.0
    %v496 = vmax.f32 %v307, 0.0
    %v497 = vmax.f32 %v310, 0.0
    %v498 = vmax.f32 %v313, 0.0
    %v499 = vmax.f32 %v316, 0.0
    %v500 = vmax.f32 %v319, 0.0
    %v501 = vmax.f32 %v322, 0.0
    %v502 = vmax.f32 %v325, 0.0
    %v503 = vmax.f32 %v328, 0.0
    %v504 = vmax.f32 %v331, 0.0
    %v505 = vmax.f32 %v334, 0.0
    %v506 = vmax.f32 %v337, 0.0
    %v507 = vmax.f32 %v340, 0.0
    %v508 = vmax.f32 %v343, 0.0
    %v509 = vmax.f32 %v346, 0.0
    %v510 = vmax.f32 %v349, 0.0
    %v511 = vmax.f32 %v352, 0.0
    %v512 = vmax.f32 %v355, 0.0
    %v513 = vmax.f32 %v358, 0.0
    %v514 = vmax.f32 %v361, 0.0
    %v515 = vmax.f32 %v364, 0.0
    %v516 = vmax.f32 %v367, 0.0
    %v517 = vmax.f32 %v370, 0.0
    %v518 = vmax.f32 %v373, 0.0
    %v519 = vmax.f32 %v376, 0.0
    %v520 = vmax.f32 %v379, 0.0
    %v521 = vmax.f32 %v382, 0.0
    %v522 = vmax.f32 %v385, 0.0
    %v523 = vmax.f32 %v388, 0.0
    %v524 = vmax.f32 %v391, 0.0
    %v525 = vmax.f32 %v394, 0.0
    %v526 = vmax.f32 %v397, 0.0
    %v527 = vmax.f32 %v400, 0.0
    %v528 = vmax.f32 %v403, 0.0
    %v529 = vmax.f32 %v406, 0.0
    %v530 = vmax.f32 %v409, 0.0
    %v531 = vmax.f32 %v412, 0.0
    %v532 = vmax.f32 %v415, 0.0
    %v533 = vmax.f32 %v418, 0.0
    %v534 = vmax.f32 %v421, 0.0
    %v535 = vmax.f32 %v424, 0.0
    %v536 = vmax.f32 %v427, 0.0
    %v537 = vmax.f32 %v430, 0.0
    %v538 = vmax.f32 %v433, 0.0
    %v539 = vmax.f32 %v436, 0.0
    %v540 = vmax.f32 %v439, 0.0
    %v541 = vmax.f32 %v442, 0.0
    %v542 = vmax.f32 %v445, 0.0
    %v543 = vmax.f32 %v448, 0.0
    %v544 = vmax.f32 %v451, 0.0
    %v545 = vmax.f32 %v454, 0.0
    %v546 = vmax.f32 %v457, 0.0
    %v547 = vmax.f32 %v460, 0.0
    %v548 = vmax.f32 %v463, 0.0
    %v549 = vmax.f32 %v466, 0.0
    %v550 = vmax.f32 %v469, 0.0
    %v551 = vmax.f32 %v472, 0.0
    %v552 = vmax.f32 %v475, 0.0
    %v553 = vmax.f32 %v478, 0.0
    %v554 = vmax.f32 %v481, 0.0
    %v555 = vmax.f32 %v484, 0.0
    %v556 = vmax.f32 %v487, 0.0
    %v557 = vmax.f32 %v490, 0.0
    %v558 = vmax.f32 %v493, 0.0
    %v559 = vlaneseq
    %v560 = vshrl.u32 %v559, 7
    %v561 = vlaneseq
    %v562 = vand.u32 %v561, 127
    %v563 = vadd.s32 %v562, 128
    %v564 = vadd.s32 %v562, 256
    %v565 = vadd.s32 %v562, 384
    %v566 = vmul.u32 %v560, 256
    %vm567 = vcmp.ge.s32.totalorder %v562, %v566
    %vm568 = vcmp.ge.s32.totalorder %v563, %v566
    %vm569 = vcmp.ge.s32.totalorder %v564, %v566
    %vm570 = vcmp.ge.s32.totalorder %v565, %v566
    %v571 = vadd.s32 %v566, 256
    %vm572 = vcmp.lt.s32.totalorder %v562, %v571
    %vm573 = vcmp.lt.s32.totalorder %v563, %v571
    %vm574 = vcmp.lt.s32.totalorder %v564, %v571
    %vm575 = vcmp.lt.s32.totalorder %v565, %v571
    %vm576 = vmand %vm567, %vm572
    %vm577 = vmand %vm568, %vm573
    %vm578 = vmand %vm569, %vm574
    %vm579 = vmand %vm570, %vm575
    %v580 = vsel %vm576, 0.00390625, 0.0
    %v581 = vsel %vm577, 0.00390625, 0.0
    %v582 = vsel %vm578, 0.00390625, 0.0
    %v583 = vsel %vm579, 0.00390625, 0.0
    %584 = vmatpush.msra.mxu0 %v510
    %585 = vmatpush.msra.mxu0 %v509
    %586 = vmatpush.msra.mxu0 %v508
    %587 = vmatpush.msra.mxu0 %v507
    %588 = vmatpush.msra.mxu0 %v506
    %589 = vmatpush.msra.mxu0 %v505
    %590 = vmatpush.msra.mxu0 %v504
    %591 = vmatpush.msra.mxu0 %v503
    %592 = vmatpush.msra.mxu0 %v502
    %593 = vmatpush.msra.mxu0 %v501
    %594 = vmatpush.msra.mxu0 %v500
    %595 = vmatpush.msra.mxu0 %v499
    %596 = vmatpush.msra.mxu0 %v498
    %597 = vmatpush.msra.mxu0 %v497
    %598 = vmatpush.msra.mxu0 %v496
    %599 = vmatpush.msra.mxu0 %v495
    %600 = vmatmul.f32.gmra.mxu0 %v580
    %v601 = vpop.f32.mrf.mxu0
    %v602 = vadd.f32 0.0, %v601
    %603 = vdwg.mxu0
    %604 = vmatpush.msra.mxu0 %v526
    %605 = vmatpush.msra.mxu0 %v525
    %606 = vmatpush.msra.mxu0 %v524
    %607 = vmatpush.msra.mxu0 %v523
    %608 = vmatpush.msra.mxu0 %v522
    %609 = vmatpush.msra.mxu0 %v521
    %610 = vmatpush.msra.mxu0 %v520
    %611 = vmatpush.msra.mxu0 %v519
    %612 = vmatpush.msra.mxu0 %v518
    %613 = vmatpush.msra.mxu0 %v517
    %614 = vmatpush.msra.mxu0 %v516
    %615 = vmatpush.msra.mxu0 %v515
    %616 = vmatpush.msra.mxu0 %v514
    %617 = vmatpush.msra.mxu0 %v513
    %618 = vmatpush.msra.mxu0 %v512
    %619 = vmatpush.msra.mxu0 %v511
    %620 = vmatmul.f32.gmra.mxu0 %v581
    %v621 = vpop.f32.mrf.mxu0
    %v622 = vadd.f32 %v602, %v621
    %623 = vdwg.mxu0
    %624 = vmatpush.msra.mxu0 %v542
    %625 = vmatpush.msra.mxu0 %v541
    %626 = vmatpush.msra.mxu0 %v540
    %627 = vmatpush.msra.mxu0 %v539
    %628 = vmatpush.msra.mxu0 %v538
    %629 = vmatpush.msra.mxu0 %v537
    %630 = vmatpush.msra.mxu0 %v536
    %631 = vmatpush.msra.mxu0 %v535
    %632 = vmatpush.msra.mxu0 %v534
    %633 = vmatpush.msra.mxu0 %v533
    %634 = vmatpush.msra.mxu0 %v532
    %635 = vmatpush.msra.mxu0 %v531
    %636 = vmatpush.msra.mxu0 %v530
    %637 = vmatpush.msra.mxu0 %v529
    %638 = vmatpush.msra.mxu0 %v528
    %639 = vmatpush.msra.mxu0 %v527
    %640 = vmatmul.f32.gmra.mxu0 %v582
    %v641 = vpop.f32.mrf.mxu0
    %v642 = vadd.f32 %v622, %v641
    %643 = vdwg.mxu0
    %644 = vmatpush.msra.mxu0 %v558
    %645 = vmatpush.msra.mxu0 %v557
    %646 = vmatpush.msra.mxu0 %v556
    %647 = vmatpush.msra.mxu0 %v555
    %648 = vmatpush.msra.mxu0 %v554
    %649 = vmatpush.msra.mxu0 %v553
    %650 = vmatpush.msra.mxu0 %v552
    %651 = vmatpush.msra.mxu0 %v551
    %652 = vmatpush.msra.mxu0 %v550
    %653 = vmatpush.msra.mxu0 %v549
    %654 = vmatpush.msra.mxu0 %v548
    %655 = vmatpush.msra.mxu0 %v547
    %656 = vmatpush.msra.mxu0 %v546
    %657 = vmatpush.msra.mxu0 %v545
    %658 = vmatpush.msra.mxu0 %v544
    %659 = vmatpush.msra.mxu0 %v543
    %660 = vmatmul.f32.gmra.mxu0 %v583
    %v661 = vpop.f32.mrf.mxu0
    %v662 = vadd.f32 %v642, %v661
    %663 = vdwg.mxu0
    %v664 = vld [vmem:[%s3] sm:$0xff]
    %v665 = vld [vmem:[%s3 + $0x8] sm:$0xff]
    %v666 = vld [vmem:[%s3 + $0x10] sm:$0xff]
    %v667 = vld [vmem:[%s3 + $0x18] sm:$0xff]
    %v668 = vld [vmem:[%s3 + $0x20] sm:$0xff]
    %v669 = vld [vmem:[%s3 + $0x28] sm:$0xff]
    %v670 = vld [vmem:[%s3 + $0x30] sm:$0xff]
    %v671 = vld [vmem:[%s3 + $0x38] sm:$0xff]
    %v672 = vperm.slane %v18, 1
    %vm673 = vcmask 523264
    %v675 = vsel %vm673, %v662, 0
    %677 = vmatpush.msra.mxu0 0.0
    %678 = vmatpush.msra.mxu0 0.0
    %679 = vmatpush.msra.mxu0 0.0
    %680 = vmatpush.msra.mxu0 0.0
    %681 = vmatpush.msra.mxu0 0.0
    %682 = vmatpush.msra.mxu0 0.0
    %683 = vmatpush.msra.mxu0 0.0
    %684 = vmatpush.msra.mxu0 0.0
    %685 = vmatpush.msra.mxu0 %v671
    %686 = vmatpush.msra.mxu0 %v670
    %687 = vmatpush.msra.mxu0 %v669
    %688 = vmatpush.msra.mxu0 %v668
    %689 = vmatpush.msra.mxu0 %v667
    %690 = vmatpush.msra.mxu0 %v666
    %691 = vmatpush.msra.mxu0 %v665
    %692 = vmatpush.msra.mxu0 %v664
    %693 = vmatmul.f32.gmra.mxu0 %v675
    %v694 = vpop.f32.mrf.mxu0
    %v695 = vadd.f32 %v672, %v694
    %696 = vdwg.mxu0
    %vm697 = vcmask 58368
    %698 = vst.msk [vmem:[#allocation2] sm:$0x3] %vm697, %v695
    // Predicated region
    $region18: #{stacking_forward.1} parent=1 // pred_check
      _
    $region19: #{stacking_forward.1} parent=1 // pred_check_branch
      %700 = sbr.rel (0) target = $region21
    $region20: #{stacking_forward.1} parent=1 // pred_region
      %702 = vsyncadd [#allocation3], 0
      %s704 = sshll.u32 [#allocation2], 4
      %s705 = int_to_ptr.vmem [resolvable:$true] %s704
      %s706 = sshll.u32 %s4, 4
      %s707 = int_to_ptr.hbm [resolvable:$true] %s706
      %709 = dma.vmem_to_hbm [thread:$0]  %s705, 32, %s707, [#allocation3]
    $region21: #{stacking_forward.1} parent=1 // pred_fallthru
      _
    // Predicated region
    $region22: #{stacking_forward.1} parent=1 // pred_check
      _
    $region23: #{stacking_forward.1} parent=1 // pred_check_branch
      %711 = sbr.rel (0) target = $region25
    $region24: #{stacking_forward.1} parent=1 // pred_region
      %713 = dma.done [#allocation3], 32
    $region25: #{stacking_forward.1} parent=1 // pred_fallthru
      _
    %714 = vsyncpa [#allocation3], 1

</llo_original>
